<compile_context>
chip_gen: v7x
topology: tpu7x:2x2x1
jax: 0.10.0
libtpu: 0.0.40
codegen_flags: <defaults>
</compile_context>

<pallas_src>
import numpy as np
import jax
import jax.numpy as jnp
from jax.experimental import pallas as pl
from jax.experimental.pallas import tpu as pltpu


def _round_up(x, m):
    return (x + m - 1) // m * m


def _mlp_kernel(x_ref, w1_ref, w2_ref, w3_ref, ws_ref, b_ref, alpha_ref, out_ref):
    # x_ref:  (bm, INp)          matmul dtype (f32 or bf16)
    # w1_ref: (INp,  OUTp)       pre-transposed (in, out), matmul dtype
    # w2_ref: (OUTp, OUTp)
    # w3_ref: (OUTp, OUTp)
    # ws_ref: (INp,  OUTp)       shortcut linear
    # b_ref:  (4, OUTp) f32      rows = [b1, b2, b3, b_shortcut]
    # alpha_ref: (3,) f32 in SMEM (PReLU alphas)
    # out_ref: (bm, OUTp) f32
    mm_dtype = w1_ref.dtype
    x = x_ref[...]

    def prelu(v, a):
        return jnp.where(v >= 0, v, a * v)

    # ffn branch: three Linear + PReLU (MXU matmuls, f32 accumulation, f32 epilogue)
    h = jnp.dot(x, w1_ref[...], preferred_element_type=jnp.float32)
    h = prelu(h + b_ref[0:1, :], alpha_ref[0])
    h = jnp.dot(h.astype(mm_dtype), w2_ref[...], preferred_element_type=jnp.float32)
    h = prelu(h + b_ref[1:2, :], alpha_ref[1])
    h = jnp.dot(h.astype(mm_dtype), w3_ref[...], preferred_element_type=jnp.float32)
    h = prelu(h + b_ref[2:3, :], alpha_ref[2])

    # shortcut branch + residual add
    sc = jnp.dot(x, ws_ref[...], preferred_element_type=jnp.float32)
    out_ref[...] = (h + sc + b_ref[3:4, :]).astype(out_ref.dtype)


def mlp_forward(x, params, *, block_m=512, matmul_dtype=jnp.float32):
    """params = (w1, b1, w2, b2, w3, b3, ws, bs, alphas) in torch layout (W: (out, in))."""
    w1, b1, w2, b2, w3, b3, ws, bs, alphas = params
    in_ft = x.shape[-1]
    out_ft = w1.shape[0]
    lead = x.shape[:-1]
    M = int(np.prod(lead)) if lead else 1

    LANE, SUB = 128, 8
    INp = _round_up(in_ft, LANE)
    OUTp = _round_up(out_ft, LANE)
    bm = min(block_m, _round_up(M, SUB))
    Mp = _round_up(M, bm)

    # Pad + (optionally) cast the input once in the wrapper.
    x2 = x.reshape(M, in_ft).astype(jnp.float32)
    x_p = jnp.zeros((Mp, INp), matmul_dtype).at[:M, :in_ft].set(x2.astype(matmul_dtype))

    # One-time weight transpose + zero-pad to lane-dense shapes.
    def pad_wt(w, rows):
        wt = jnp.asarray(w, jnp.float32).T.astype(matmul_dtype)  # (in, out)
        return jnp.zeros((rows, OUTp), matmul_dtype).at[:wt.shape[0], :wt.shape[1]].set(wt)

    w1p = pad_wt(w1, INp)
    w2p = pad_wt(w2, OUTp)
    w3p = pad_wt(w3, OUTp)
    wsp = pad_wt(ws, INp)

    bias = jnp.zeros((4, OUTp), jnp.float32)
    bias = bias.at[0, :out_ft].set(b1)
    bias = bias.at[1, :out_ft].set(b2)
    bias = bias.at[2, :out_ft].set(b3)
    bias = bias.at[3, :out_ft].set(bs)

    alphas = jnp.asarray(alphas, jnp.float32).reshape(3)

    grid = (Mp // bm,)
    out = pl.pallas_call(
        _mlp_kernel,
        out_shape=jax.ShapeDtypeStruct((Mp, OUTp), jnp.float32),
        grid_spec=pltpu.PrefetchScalarGridSpec(
            num_scalar_prefetch=0,
            grid=grid,
            in_specs=[
                pl.BlockSpec((bm, INp), lambda i: (i, 0)),          # x row tile
                pl.BlockSpec((INp, OUTp), lambda i: (0, 0)),        # W1^T (resident)
                pl.BlockSpec((OUTp, OUTp), lambda i: (0, 0)),       # W2^T (resident)
                pl.BlockSpec((OUTp, OUTp), lambda i: (0, 0)),       # W3^T (resident)
                pl.BlockSpec((INp, OUTp), lambda i: (0, 0)),        # Ws^T (resident)
                pl.BlockSpec((4, OUTp), lambda i: (0, 0)),          # biases (resident)
                pl.BlockSpec(memory_space=pltpu.MemorySpace.SMEM),  # PReLU alphas
            ],
            out_specs=pl.BlockSpec((bm, OUTp), lambda i: (i, 0)),
        ),
        compiler_params=pltpu.CompilerParams(
            dimension_semantics=("parallel",),      # row tiles independent (v7x: 2 TCs)
            vmem_limit_bytes=48 * 1024 * 1024,
        ),
    )(x_p, w1p, w2p, w3p, wsp, bias, alphas)

    out = out[:M, :out_ft].reshape(lead + (out_ft,))
    return out.astype(x.dtype)


def mlp_reference(x, params):
    w1, b1, w2, b2, w3, b3, ws, bs, alphas = params

    def prelu(v, a):
        return jnp.where(v >= 0, v, a * v)

    h = prelu(x @ w1.T + b1, alphas[0])
    h = prelu(h @ w2.T + b2, alphas[1])
    h = prelu(h @ w3.T + b3, alphas[2])
    return h + (x @ ws.T + bs)


if __name__ == "__main__":
    key = jax.random.PRNGKey(0)
    ks = jax.random.split(key, 9)

    B, N, IN_FT, OUT_FT = 2, 16, 32, 32
    x = jax.random.normal(ks[0], (B, N, IN_FT), jnp.float32)

    def linear_init(kw, kb, out_f, in_f):
        # torch.nn.Linear-style uniform init (deterministic via PRNGKey(0) splits)
        lim = float(np.sqrt(1.0 / in_f))
        w = jax.random.uniform(kw, (out_f, in_f), jnp.float32, -lim, lim)
        b = jax.random.uniform(kb, (out_f,), jnp.float32, -lim, lim)
        return w, b

    w1, b1 = linear_init(ks[1], ks[2], OUT_FT, IN_FT)
    w2, b2 = linear_init(ks[3], ks[4], OUT_FT, OUT_FT)
    w3, b3 = linear_init(ks[5], ks[6], OUT_FT, OUT_FT)
    ws, bs = linear_init(ks[7], ks[8], OUT_FT, IN_FT)
    alphas = jnp.full((3,), 0.25, jnp.float32)      # nn.PReLU default init

    params = (w1, b1, w2, b2, w3, b3, ws, bs, alphas)
    ref = mlp_reference(x, params)

    # f32 path: matches PyTorch/f32 reference tightly.
    out = jax.block_until_ready(mlp_forward(x, params))
    np.testing.assert_allclose(np.asarray(out), np.asarray(ref), rtol=1e-5, atol=1e-5)

    # bf16-matmul path (v6e/v7x MXU rate), f32 accumulation + f32 epilogue.
    out_bf16 = jax.block_until_ready(
        mlp_forward(x, params, matmul_dtype=jnp.bfloat16))
    np.testing.assert_allclose(np.asarray(out_bf16), np.asarray(ref),
                               rtol=5e-2, atol=5e-2)

    print("KERNEL_OK")
</pallas_src>

<mosaic_0001>
module attributes {stable_mosaic.version = 11 : i64} {
  func.func @_mlp_kernel(%arg0: i32, %arg1: memref<32x128xf32, #tpu.memory_space<vmem>>, %arg2: memref<128x128xf32, #tpu.memory_space<vmem>>, %arg3: memref<128x128xf32, #tpu.memory_space<vmem>>, %arg4: memref<128x128xf32, #tpu.memory_space<vmem>>, %arg5: memref<128x128xf32, #tpu.memory_space<vmem>>, %arg6: memref<4x128xf32, #tpu.memory_space<vmem>>, %arg7: memref<3xf32, #tpu.memory_space<smem>>, %arg8: memref<32x128xf32, #tpu.memory_space<vmem>>) attributes {dimension_semantics = [#tpu.dimension_semantics<parallel>], iteration_bounds = array<i64: 1>, scalar_prefetch = 0 : i64, scratch_operands = 0 : i64, tpu.core_type = #tpu.core_type<tc>, window_params = [{transform_indices = @transform_0, window_bounds = array<i64: 32, 128>}, {pipeline_mode = #tpu.pipeline_mode<synchronous>, transform_indices = @transform_1, window_bounds = array<i64: 128, 128>}, {pipeline_mode = #tpu.pipeline_mode<synchronous>, transform_indices = @transform_2, window_bounds = array<i64: 128, 128>}, {pipeline_mode = #tpu.pipeline_mode<synchronous>, transform_indices = @transform_3, window_bounds = array<i64: 128, 128>}, {pipeline_mode = #tpu.pipeline_mode<synchronous>, transform_indices = @transform_4, window_bounds = array<i64: 128, 128>}, {pipeline_mode = #tpu.pipeline_mode<synchronous>, transform_indices = @transform_5, window_bounds = array<i64: 4, 128>}, {transform_indices = @transform_6, window_bounds = array<i64: 3>}, {transform_indices = @transform_7, window_bounds = array<i64: 32, 128>}]} {
    %c0 = arith.constant 0 : index
    %c0_0 = arith.constant 0 : index
    %0 = vector.load %arg1[%c0, %c0_0] : memref<32x128xf32, #tpu.memory_space<vmem>>, vector<32x128xf32>
    %c0_1 = arith.constant 0 : index
    %c0_2 = arith.constant 0 : index
    %1 = vector.load %arg2[%c0_1, %c0_2] : memref<128x128xf32, #tpu.memory_space<vmem>>, vector<128x128xf32>
    %cst = arith.constant dense<0.000000e+00> : vector<32x128xf32>
    %2 = tpu.matmul %0, %1, %cst {dimension_numbers = #tpu.dot_dimension_numbers<[1], [0], [0], [1], [0, 0, 1, 1], [], []>} : vector<32x128xf32>, vector<128x128xf32>, vector<32x128xf32> -> vector<32x128xf32>
    %c0_3 = arith.constant 0 : index
    %c0_4 = arith.constant 0 : index
    %3 = vector.load %arg6[%c0_3, %c0_4] : memref<4x128xf32, #tpu.memory_space<vmem>>, vector<1x128xf32>
    %4 = vector.broadcast %3 : vector<1x128xf32> to vector<32x128xf32>
    %5 = arith.addf %2, %4 : vector<32x128xf32>
    %c0_5 = arith.constant 0 : index
    %6 = memref.load %arg7[%c0_5] : memref<3xf32, #tpu.memory_space<smem>>
    %cst_6 = arith.constant 0.000000e+00 : f32
    %7 = vector.broadcast %cst_6 : f32 to vector<32x128xf32>
    %8 = arith.cmpf oge, %5, %7 : vector<32x128xf32>
    %9 = vector.broadcast %6 : f32 to vector<32x128xf32>
    %10 = arith.mulf %9, %5 : vector<32x128xf32>
    %11 = arith.select %8, %5, %10 : vector<32x128xi1>, vector<32x128xf32>
    %c0_7 = arith.constant 0 : index
    %c0_8 = arith.constant 0 : index
    %12 = vector.load %arg3[%c0_7, %c0_8] : memref<128x128xf32, #tpu.memory_space<vmem>>, vector<128x128xf32>
    %cst_9 = arith.constant dense<0.000000e+00> : vector<32x128xf32>
    %13 = tpu.matmul %11, %12, %cst_9 {dimension_numbers = #tpu.dot_dimension_numbers<[1], [0], [0], [1], [0, 0, 1, 1], [], []>} : vector<32x128xf32>, vector<128x128xf32>, vector<32x128xf32> -> vector<32x128xf32>
    %c1 = arith.constant 1 : index
    %c0_10 = arith.constant 0 : index
    %14 = vector.load %arg6[%c1, %c0_10] : memref<4x128xf32, #tpu.memory_space<vmem>>, vector<1x128xf32>
    %15 = vector.broadcast %14 : vector<1x128xf32> to vector<32x128xf32>
    %16 = arith.addf %13, %15 : vector<32x128xf32>
    %c1_11 = arith.constant 1 : index
    %17 = memref.load %arg7[%c1_11] : memref<3xf32, #tpu.memory_space<smem>>
    %cst_12 = arith.constant 0.000000e+00 : f32
    %18 = vector.broadcast %cst_12 : f32 to vector<32x128xf32>
    %19 = arith.cmpf oge, %16, %18 : vector<32x128xf32>
    %20 = vector.broadcast %17 : f32 to vector<32x128xf32>
    %21 = arith.mulf %20, %16 : vector<32x128xf32>
    %22 = arith.select %19, %16, %21 : vector<32x128xi1>, vector<32x128xf32>
    %c0_13 = arith.constant 0 : index
    %c0_14 = arith.constant 0 : index
    %23 = vector.load %arg4[%c0_13, %c0_14] : memref<128x128xf32, #tpu.memory_space<vmem>>, vector<128x128xf32>
    %cst_15 = arith.constant dense<0.000000e+00> : vector<32x128xf32>
    %24 = tpu.matmul %22, %23, %cst_15 {dimension_numbers = #tpu.dot_dimension_numbers<[1], [0], [0], [1], [0, 0, 1, 1], [], []>} : vector<32x128xf32>, vector<128x128xf32>, vector<32x128xf32> -> vector<32x128xf32>
    %c2 = arith.constant 2 : index
    %c0_16 = arith.constant 0 : index
    %25 = vector.load %arg6[%c2, %c0_16] : memref<4x128xf32, #tpu.memory_space<vmem>>, vector<1x128xf32>
    %26 = vector.broadcast %25 : vector<1x128xf32> to vector<32x128xf32>
    %27 = arith.addf %24, %26 : vector<32x128xf32>
    %c2_17 = arith.constant 2 : index
    %28 = memref.load %arg7[%c2_17] : memref<3xf32, #tpu.memory_space<smem>>
    %cst_18 = arith.constant 0.000000e+00 : f32
    %29 = vector.broadcast %cst_18 : f32 to vector<32x128xf32>
    %30 = arith.cmpf oge, %27, %29 : vector<32x128xf32>
    %31 = vector.broadcast %28 : f32 to vector<32x128xf32>
    %32 = arith.mulf %31, %27 : vector<32x128xf32>
    %33 = arith.select %30, %27, %32 : vector<32x128xi1>, vector<32x128xf32>
    %c0_19 = arith.constant 0 : index
    %c0_20 = arith.constant 0 : index
    %34 = vector.load %arg5[%c0_19, %c0_20] : memref<128x128xf32, #tpu.memory_space<vmem>>, vector<128x128xf32>
    %cst_21 = arith.constant dense<0.000000e+00> : vector<32x128xf32>
    %35 = tpu.matmul %0, %34, %cst_21 {dimension_numbers = #tpu.dot_dimension_numbers<[1], [0], [0], [1], [0, 0, 1, 1], [], []>} : vector<32x128xf32>, vector<128x128xf32>, vector<32x128xf32> -> vector<32x128xf32>
    %36 = arith.addf %33, %35 : vector<32x128xf32>
    %c3 = arith.constant 3 : index
    %c0_22 = arith.constant 0 : index
    %37 = vector.load %arg6[%c3, %c0_22] : memref<4x128xf32, #tpu.memory_space<vmem>>, vector<1x128xf32>
    %38 = vector.broadcast %37 : vector<1x128xf32> to vector<32x128xf32>
    %39 = arith.addf %36, %38 : vector<32x128xf32>
    %c0_23 = arith.constant 0 : index
    %c0_24 = arith.constant 0 : index
    %40 = vector.load %arg8[%c0_23, %c0_24] : memref<32x128xf32, #tpu.memory_space<vmem>>, vector<32x128xf32>
    tpu.vector_store %arg8[%c0_23, %c0_24], %39 {strides = array<i32>} : memref<32x128xf32, #tpu.memory_space<vmem>>, vector<32x128xf32>,
    return
  }
  func.func @transform_0(%arg0: i32) -> (i32, i32) {
    %c0_i32 = arith.constant 0 : i32
    %c0_i32_0 = arith.constant 0 : i32
    return %arg0, %c0_i32 : i32, i32
  }
  func.func @transform_1(%arg0: i32) -> (i32, i32) {
    %c0_i32 = arith.constant 0 : i32
    %c0_i32_0 = arith.constant 0 : i32
    %c0_i32_1 = arith.constant 0 : i32
    return %c0_i32, %c0_i32_0 : i32, i32
  }
  func.func @transform_2(%arg0: i32) -> (i32, i32) {
    %c0_i32 = arith.constant 0 : i32
    %c0_i32_0 = arith.constant 0 : i32
    %c0_i32_1 = arith.constant 0 : i32
    return %c0_i32, %c0_i32_0 : i32, i32
  }
  func.func @transform_3(%arg0: i32) -> (i32, i32) {
    %c0_i32 = arith.constant 0 : i32
    %c0_i32_0 = arith.constant 0 : i32
    %c0_i32_1 = arith.constant 0 : i32
    return %c0_i32, %c0_i32_0 : i32, i32
  }
  func.func @transform_4(%arg0: i32) -> (i32, i32) {
    %c0_i32 = arith.constant 0 : i32
    %c0_i32_0 = arith.constant 0 : i32
    %c0_i32_1 = arith.constant 0 : i32
    return %c0_i32, %c0_i32_0 : i32, i32
  }
  func.func @transform_5(%arg0: i32) -> (i32, i32) {
    %c0_i32 = arith.constant 0 : i32
    %c0_i32_0 = arith.constant 0 : i32
    %c0_i32_1 = arith.constant 0 : i32
    return %c0_i32, %c0_i32_0 : i32, i32
  }
  func.func @transform_6(%arg0: i32) -> i32 {
    %c0_i32 = arith.constant 0 : i32
    %c0_i32_0 = arith.constant 0 : i32
    return %c0_i32 : i32
  }
  func.func @transform_7(%arg0: i32) -> (i32, i32) {
    %c0_i32 = arith.constant 0 : i32
    %c0_i32_0 = arith.constant 0 : i32
    return %arg0, %c0_i32 : i32, i32
  }
}

</mosaic_0001>

<llo_original>
// kernel: tpu_custom_call.1
$region0: #{tpu_custom_call.1}
  #allocation0 [shape = 'u32[]', space=smem, size = 0x4, offset = 0x4, fixed_abs, tag = 'smem constant byte address 0x4 - core index']
  #allocation1 [shape = 'u32[144,128]{1,0:T(1,128)}', space=vmem, size = 0x12000, scoped, tag = 'internal scratch']
  %s0 = inlined_call_operand.hbm [shape: f32[32,128], index: 0, kind: input, shape index: {}]
  %s1 = inlined_call_operand.hbm [shape: f32[128,128], index: 1, kind: input, shape index: {}]
  %s2 = inlined_call_operand.hbm [shape: f32[128,128], index: 2, kind: input, shape index: {}]
  %s3 = inlined_call_operand.hbm [shape: f32[128,128], index: 3, kind: input, shape index: {}]
  %s4 = inlined_call_operand.hbm [shape: f32[128,128], index: 4, kind: input, shape index: {}]
  %s5 = inlined_call_operand.vmem [shape: f32[4,128], index: 5, kind: input, shape index: {}]
  %s6 = inlined_call_operand.vmem [shape: f32[3], index: 6, kind: input, shape index: {}]
  %s7 = inlined_call_operand.hbm [shape: f32[32,128], index: 7, kind: output, shape index: {}]
  %s8 = sld [smem:[#allocation0]]
  $region62: #{tpu_custom_call.1} parent=0
    _
  %s10 = ssub.s32 1, %s8
  %s11 = scalar_select 0, %s10, %s8
  $region1: #{tpu_custom_call.1} parent=0
    #allocation2 [shape = 'u8[16384]{0}', space=vmem, size = 0x4000, scoped, tag = 'input window, operand 0, single buffered']
    #allocation3 [shape = 's32[1]{0}', space=sflag, size = 0x4, scoped, tag = 'scoped memory for tpu_custom_call.1']
    #allocation4 [shape = 's32[1]{0}', space=sflag, size = 0x4, scoped, tag = 'scoped memory for tpu_custom_call.1']
    #allocation5 [shape = 's32[1]{0}', space=sflag, size = 0x4, scoped, tag = 'scoped memory for tpu_custom_call.1']
    #allocation6 [shape = 'u8[65536]{0}', space=vmem, size = 0x10000, scoped, tag = 'input window, operand 1, single buffered']
    #allocation7 [shape = 's32[1]{0}', space=sflag, size = 0x4, scoped, tag = 'scoped memory for tpu_custom_call.1']
    #allocation8 [shape = 'u8[65536]{0}', space=vmem, size = 0x10000, scoped, tag = 'input window, operand 2, single buffered']
    #allocation9 [shape = 'u8[65536]{0}', space=vmem, size = 0x10000, scoped, tag = 'input window, operand 3, single buffered']
    #allocation10 [shape = 's32[1]{0}', space=sflag, size = 0x4, scoped, tag = 'scoped memory for tpu_custom_call.1']
    #allocation11 [shape = 'u8[65536]{0}', space=vmem, size = 0x10000, scoped, tag = 'input window, operand 4, single buffered']
    #allocation12 [shape = 'u8[512]{0}', space=smem, size = 0x200, scoped, tag = 'input window, operand 6, single buffered']
    #allocation13 [shape = 'u8[16384]{0}', space=vmem, size = 0x4000, scoped, tag = 'output window, operand 0, single buffered']
    %12 = vsyncpa [#allocation3], 0
    %13 = vsyncpa [#allocation7], 0
    %14 = vsyncpa [#allocation10], 0
    %15 = vsyncpa [#allocation5], 0
    %16 = vsyncpa [#allocation4], 0
    // Predicated region
    $region2: #{tpu_custom_call.1} parent=1 // pred_check
      _
    $region3: #{tpu_custom_call.1} parent=1 // pred_check_branch
      %18 = sbr.rel (0) target = $region5
    $region4: #{tpu_custom_call.1} parent=1 // pred_region
      %s20 = ssub.s32 512, 512
      %21 = vsyncadd [#allocation3], %s20
      %s22 = sshll.u32 [#allocation2], 4
      %s23 = int_to_ptr.vmem [resolvable:$true] %s22
      %28 = dma.hbm_to_vmem [thread:$0]  %s0, 512, %s23, [#allocation3], 128, 128, 8
    $region5: #{tpu_custom_call.1} parent=1 // pred_fallthru
      _
    // Predicated region
    $region6: #{tpu_custom_call.1} parent=1 // pred_check
      _
    $region7: #{tpu_custom_call.1} parent=1 // pred_check_branch
      %30 = sbr.rel (0) target = $region9
    $region8: #{tpu_custom_call.1} parent=1 // pred_region
      %s32 = ssub.s32 2048, 2048
      %33 = vsyncadd [#allocation7], %s32
      %s34 = sshll.u32 [#allocation6], 4
      %s35 = int_to_ptr.vmem [resolvable:$true] %s34
      %40 = dma.hbm_to_vmem [thread:$0]  %s1, 2048, %s35, [#allocation7], 128, 128, 8
    $region9: #{tpu_custom_call.1} parent=1 // pred_fallthru
      _
    // Predicated region
    $region10: #{tpu_custom_call.1} parent=1 // pred_check
      _
    $region11: #{tpu_custom_call.1} parent=1 // pred_check_branch
      %42 = sbr.rel (0) target = $region13
    $region12: #{tpu_custom_call.1} parent=1 // pred_region
      %s44 = ssub.s32 2048, 2048
      %45 = vsyncadd [#allocation7], %s44
      %s46 = sshll.u32 [#allocation8], 4
      %s47 = int_to_ptr.vmem [resolvable:$true] %s46
      %52 = dma.hbm_to_vmem [thread:$0]  %s2, 2048, %s47, [#allocation7], 128, 128, 8
    $region13: #{tpu_custom_call.1} parent=1 // pred_fallthru
      _
    // Predicated region
    $region14: #{tpu_custom_call.1} parent=1 // pred_check
      _
    $region15: #{tpu_custom_call.1} parent=1 // pred_check_branch
      %54 = sbr.rel (0) target = $region17
    $region16: #{tpu_custom_call.1} parent=1 // pred_region
      %s56 = ssub.s32 2048, 2048
      %57 = vsyncadd [#allocation10], %s56
      %s58 = sshll.u32 [#allocation9], 4
      %s59 = int_to_ptr.vmem [resolvable:$true] %s58
      %64 = dma.hbm_to_vmem [thread:$0]  %s3, 2048, %s59, [#allocation10], 128, 128, 8
    $region17: #{tpu_custom_call.1} parent=1 // pred_fallthru
      _
    // Predicated region
    $region18: #{tpu_custom_call.1} parent=1 // pred_check
      _
    $region19: #{tpu_custom_call.1} parent=1 // pred_check_branch
      %66 = sbr.rel (0) target = $region21
    $region20: #{tpu_custom_call.1} parent=1 // pred_region
      %s68 = ssub.s32 2048, 2048
      %69 = vsyncadd [#allocation10], %s68
      %s70 = sshll.u32 [#allocation11], 4
      %s71 = int_to_ptr.vmem [resolvable:$true] %s70
      %76 = dma.hbm_to_vmem [thread:$0]  %s4, 2048, %s71, [#allocation10], 128, 128, 8
    $region21: #{tpu_custom_call.1} parent=1 // pred_fallthru
      _
    // Predicated region
    $region22: #{tpu_custom_call.1} parent=1 // pred_check
      _
    $region23: #{tpu_custom_call.1} parent=1 // pred_check_branch
      %78 = sbr.rel (0) target = $region25
    $region24: #{tpu_custom_call.1} parent=1 // pred_region
      _
    $region25: #{tpu_custom_call.1} parent=1 // pred_fallthru
      _
    // Predicated region
    $region26: #{tpu_custom_call.1} parent=1 // pred_check
      _
    $region27: #{tpu_custom_call.1} parent=1 // pred_check_branch
      %80 = sbr.rel (0) target = $region29
    $region28: #{tpu_custom_call.1} parent=1 // pred_region
      %s82 = ssub.s32 16, 16
      %83 = vsyncadd [#allocation5], %s82
      %s85 = sshll.u32 %s6, 4
      %s86 = int_to_ptr.vmem [resolvable:$true] %s85
      %88 = dma.vmem_to_smem %s86, 16, [#allocation12], [#allocation5]
    $region29: #{tpu_custom_call.1} parent=1 // pred_fallthru
      _
    // Predicated region
    $region30: #{tpu_custom_call.1} parent=1 // pred_check
      _
    $region31: #{tpu_custom_call.1} parent=1 // pred_check_branch
      %90 = sbr.rel (0) target = $region33
    $region32: #{tpu_custom_call.1} parent=1 // pred_region
      %91 = dma.done [#allocation3], 512
    $region33: #{tpu_custom_call.1} parent=1 // pred_fallthru
      _
    // Predicated region
    $region34: #{tpu_custom_call.1} parent=1 // pred_check
      _
    $region35: #{tpu_custom_call.1} parent=1 // pred_check_branch
      %93 = sbr.rel (0) target = $region37
    $region36: #{tpu_custom_call.1} parent=1 // pred_region
      %94 = dma.done [#allocation7], 2048
    $region37: #{tpu_custom_call.1} parent=1 // pred_fallthru
      _
    // Predicated region
    $region38: #{tpu_custom_call.1} parent=1 // pred_check
      _
    $region39: #{tpu_custom_call.1} parent=1 // pred_check_branch
      %96 = sbr.rel (0) target = $region41
    $region40: #{tpu_custom_call.1} parent=1 // pred_region
      %97 = dma.done [#allocation7], 2048
    $region41: #{tpu_custom_call.1} parent=1 // pred_fallthru
      _
    // Predicated region
    $region42: #{tpu_custom_call.1} parent=1 // pred_check
      _
    $region43: #{tpu_custom_call.1} parent=1 // pred_check_branch
      %99 = sbr.rel (0) target = $region45
    $region44: #{tpu_custom_call.1} parent=1 // pred_region
      %100 = dma.done [#allocation10], 2048
    $region45: #{tpu_custom_call.1} parent=1 // pred_fallthru
      _
    // Predicated region
    $region46: #{tpu_custom_call.1} parent=1 // pred_check
      _
    $region47: #{tpu_custom_call.1} parent=1 // pred_check_branch
      %102 = sbr.rel (0) target = $region49
    $region48: #{tpu_custom_call.1} parent=1 // pred_region
      %103 = dma.done [#allocation10], 2048
    $region49: #{tpu_custom_call.1} parent=1 // pred_fallthru
      _
    // Predicated region
    $region50: #{tpu_custom_call.1} parent=1 // pred_check
      _
    $region51: #{tpu_custom_call.1} parent=1 // pred_check_branch
      %105 = sbr.rel (0) target = $region53
    $region52: #{tpu_custom_call.1} parent=1 // pred_region
      %106 = dma.done [#allocation5], 16
    $region53: #{tpu_custom_call.1} parent=1 // pred_fallthru
      _
    %107 = sfence
    %v108 = vld [vmem:[#allocation2] sm:$0xff]
    %v109 = vld [vmem:[#allocation2 + $0x8] sm:$0xff]
    %v110 = vld [vmem:[#allocation2 + $0x10] sm:$0xff]
    %v111 = vld [vmem:[#allocation2 + $0x18] sm:$0xff]
    %v112 = vld [vmem:[#allocation6] sm:$0xff]
    %v113 = vld [vmem:[#allocation6 + $0x8] sm:$0xff]
    %v114 = vld [vmem:[#allocation6 + $0x10] sm:$0xff]
    %v115 = vld [vmem:[#allocation6 + $0x18] sm:$0xff]
    %v116 = vld [vmem:[#allocation6 + $0x20] sm:$0xff]
    %v117 = vld [vmem:[#allocation6 + $0x28] sm:$0xff]
    %v118 = vld [vmem:[#allocation6 + $0x30] sm:$0xff]
    %v119 = vld [vmem:[#allocation6 + $0x38] sm:$0xff]
    %v120 = vld [vmem:[#allocation6 + $0x40] sm:$0xff]
    %v121 = vld [vmem:[#allocation6 + $0x48] sm:$0xff]
    %v122 = vld [vmem:[#allocation6 + $0x50] sm:$0xff]
    %v123 = vld [vmem:[#allocation6 + $0x58] sm:$0xff]
    %v124 = vld [vmem:[#allocation6 + $0x60] sm:$0xff]
    %v125 = vld [vmem:[#allocation6 + $0x68] sm:$0xff]
    %v126 = vld [vmem:[#allocation6 + $0x70] sm:$0xff]
    %v127 = vld [vmem:[#allocation6 + $0x78] sm:$0xff]
    %v128 = vld [vmem:[%s5] sm:$0x1]
    %v129 = vlaneseq
    %v130 = vshrl.u32 %v129, 7
    %v131 = vsub.s32 0, %v130
    %v132 = vrot.slane %v128, %v131
    %133 = vmatprep.subr.mxu0 0.0
    %134 = vmatpush1.msra.mxu0 %v112
    %135 = vmatprep.subr.mxu0 0.0
    %136 = vmatpush1.msra.mxu0 %v113
    %137 = vmatprep.subr.mxu0 0.0
    %138 = vmatpush1.msra.mxu0 %v114
    %139 = vmatprep.subr.mxu0 0.0
    %140 = vmatpush1.msra.mxu0 %v115
    %141 = vmatprep.subr.mxu0 0.0
    %142 = vmatpush1.msra.mxu0 %v116
    %143 = vmatprep.subr.mxu0 0.0
    %144 = vmatpush1.msra.mxu0 %v117
    %145 = vmatprep.subr.mxu0 0.0
    %146 = vmatpush1.msra.mxu0 %v118
    %147 = vmatprep.subr.mxu0 0.0
    %148 = vmatpush1.msra.mxu0 %v119
    %149 = vmatprep.subr.mxu0 0.0
    %150 = vmatpush1.msra.mxu0 %v120
    %151 = vmatprep.subr.mxu0 0.0
    %152 = vmatpush1.msra.mxu0 %v121
    %153 = vmatprep.subr.mxu0 0.0
    %154 = vmatpush1.msra.mxu0 %v122
    %155 = vmatprep.subr.mxu0 0.0
    %156 = vmatpush1.msra.mxu0 %v123
    %157 = vmatprep.subr.mxu0 0.0
    %158 = vmatpush1.msra.mxu0 %v124
    %159 = vmatprep.subr.mxu0 0.0
    %160 = vmatpush1.msra.mxu0 %v125
    %161 = vmatprep.subr.mxu0 0.0
    %162 = vmatpush1.msra.mxu0 %v126
    %163 = vmatprep.subr.mxu0 0.0
    %164 = vmatpush1.msra.mxu0 %v127
    %165 = vmatprep.subr.mxu0 0.0
    %166 = vmatpush1.msra.mxu0 0.0
    %167 = vmatprep.subr.mxu0 0.0
    %168 = vmatpush1.msra.mxu0 0.0
    %169 = vmatprep.subr.mxu0 0.0
    %170 = vmatpush1.msra.mxu0 0.0
    %171 = vmatprep.subr.mxu0 0.0
    %172 = vmatpush1.msra.mxu0 0.0
    %173 = vmatprep.subr.mxu0 0.0
    %174 = vmatpush1.msra.mxu0 0.0
    %175 = vmatprep.subr.mxu0 0.0
    %176 = vmatpush1.msra.mxu0 0.0
    %177 = vmatprep.subr.mxu0 0.0
    %178 = vmatpush1.msra.mxu0 0.0
    %179 = vmatprep.subr.mxu0 0.0
    %180 = vmatpush1.msra.mxu0 0.0
    %181 = vmatprep.subr.mxu0 0.0
    %182 = vmatpush1.msra.mxu0 0.0
    %183 = vmatprep.subr.mxu0 0.0
    %184 = vmatpush1.msra.mxu0 0.0
    %185 = vmatprep.subr.mxu0 0.0
    %186 = vmatpush1.msra.mxu0 0.0
    %187 = vmatprep.subr.mxu0 0.0
    %188 = vmatpush1.msra.mxu0 0.0
    %189 = vmatprep.subr.mxu0 0.0
    %190 = vmatpush1.msra.mxu0 0.0
    %191 = vmatprep.subr.mxu0 0.0
    %192 = vmatpush1.msra.mxu0 0.0
    %193 = vmatprep.subr.mxu0 0.0
    %194 = vmatpush1.msra.mxu0 0.0
    %195 = vmatprep.subr.mxu0 0.0
    %196 = vmatpush1.msra.mxu0 0.0
    %197 = vmatprep.mubr.f32.mxu0 0.0
    %198 = vmatmul.mubr.f32.gmra.mrb[0].mxu0 %v108
    %v199 = vpop.f32.mrb[0].mxu0
    %v200 = vadd.f32 %v132, %v199
    %v201 = vpop.f32.mrb[0].mxu0
    %202 = vmatprep.mubr.f32.mxu0 0.0
    %203 = vmatmul.mubr.f32.gmra.mrb[0].mxu0 %v109
    %v204 = vpop.f32.mrb[0].mxu0
    %v205 = vadd.f32 %v132, %v204
    %v206 = vpop.f32.mrb[0].mxu0
    %207 = vmatprep.mubr.f32.mxu0 0.0
    %208 = vmatmul.mubr.f32.gmra.mrb[0].mxu0 %v110
    %v209 = vpop.f32.mrb[0].mxu0
    %v210 = vadd.f32 %v132, %v209
    %v211 = vpop.f32.mrb[0].mxu0
    %212 = vmatprep.mubr.f32.mxu0 0.0
    %213 = vmatmul.mubr.f32.gmra.mrb[0].mxu0 %v111
    %v214 = vpop.f32.mrb[0].mxu0
    %v215 = vadd.f32 %v132, %v214
    %v216 = vpop.f32.mrb[0].mxu0
    %217 = vdwg.mxu0
    %s218 = sld [smem:[#allocation12]]
    %vm219 = vcmp.ge.f32.partialorder %v200, 0.0
    %vm220 = vcmp.ge.f32.partialorder %v205, 0.0
    %vm221 = vcmp.ge.f32.partialorder %v210, 0.0
    %vm222 = vcmp.ge.f32.partialorder %v215, 0.0
    %v223 = vstv %s218
    %v224 = vmul.f32 %v223, %v200
    %v225 = vmul.f32 %v223, %v205
    %v226 = vmul.f32 %v223, %v210
    %v227 = vmul.f32 %v223, %v215
    %v228 = vsel %vm219, %v200, %v224
    %v229 = vsel %vm220, %v205, %v225
    %v230 = vsel %vm221, %v210, %v226
    %v231 = vsel %vm222, %v215, %v227
    %v232 = vld [vmem:[#allocation8] sm:$0xff]
    %v233 = vld [vmem:[#allocation8 + $0x8] sm:$0xff]
    %v234 = vld [vmem:[#allocation8 + $0x10] sm:$0xff]
    %v235 = vld [vmem:[#allocation8 + $0x18] sm:$0xff]
    %v236 = vld [vmem:[#allocation8 + $0x20] sm:$0xff]
    %v237 = vld [vmem:[#allocation8 + $0x28] sm:$0xff]
    %v238 = vld [vmem:[#allocation8 + $0x30] sm:$0xff]
    %v239 = vld [vmem:[#allocation8 + $0x38] sm:$0xff]
    %v240 = vld [vmem:[#allocation8 + $0x40] sm:$0xff]
    %v241 = vld [vmem:[#allocation8 + $0x48] sm:$0xff]
    %v242 = vld [vmem:[#allocation8 + $0x50] sm:$0xff]
    %v243 = vld [vmem:[#allocation8 + $0x58] sm:$0xff]
    %v244 = vld [vmem:[#allocation8 + $0x60] sm:$0xff]
    %v245 = vld [vmem:[#allocation8 + $0x68] sm:$0xff]
    %v246 = vld [vmem:[#allocation8 + $0x70] sm:$0xff]
    %v247 = vld [vmem:[#allocation8 + $0x78] sm:$0xff]
    %v248 = vld [vmem:[%s5 + $0x1] sm:$0x1]
    %v249 = vlaneseq
    %v250 = vshrl.u32 %v249, 7
    %v251 = vsub.s32 0, %v250
    %v252 = vrot.slane %v248, %v251
    %253 = vmatprep.subr.mxu0 0.0
    %254 = vmatpush1.msra.mxu0 %v232
    %255 = vmatprep.subr.mxu0 0.0
    %256 = vmatpush1.msra.mxu0 %v233
    %257 = vmatprep.subr.mxu0 0.0
    %258 = vmatpush1.msra.mxu0 %v234
    %259 = vmatprep.subr.mxu0 0.0
    %260 = vmatpush1.msra.mxu0 %v235
    %261 = vmatprep.subr.mxu0 0.0
    %262 = vmatpush1.msra.mxu0 %v236
    %263 = vmatprep.subr.mxu0 0.0
    %264 = vmatpush1.msra.mxu0 %v237
    %265 = vmatprep.subr.mxu0 0.0
    %266 = vmatpush1.msra.mxu0 %v238
    %267 = vmatprep.subr.mxu0 0.0
    %268 = vmatpush1.msra.mxu0 %v239
    %269 = vmatprep.subr.mxu0 0.0
    %270 = vmatpush1.msra.mxu0 %v240
    %271 = vmatprep.subr.mxu0 0.0
    %272 = vmatpush1.msra.mxu0 %v241
    %273 = vmatprep.subr.mxu0 0.0
    %274 = vmatpush1.msra.mxu0 %v242
    %275 = vmatprep.subr.mxu0 0.0
    %276 = vmatpush1.msra.mxu0 %v243
    %277 = vmatprep.subr.mxu0 0.0
    %278 = vmatpush1.msra.mxu0 %v244
    %279 = vmatprep.subr.mxu0 0.0
    %280 = vmatpush1.msra.mxu0 %v245
    %281 = vmatprep.subr.mxu0 0.0
    %282 = vmatpush1.msra.mxu0 %v246
    %283 = vmatprep.subr.mxu0 0.0
    %284 = vmatpush1.msra.mxu0 %v247
    %285 = vmatprep.subr.mxu0 0.0
    %286 = vmatpush1.msra.mxu0 0.0
    %287 = vmatprep.subr.mxu0 0.0
    %288 = vmatpush1.msra.mxu0 0.0
    %289 = vmatprep.subr.mxu0 0.0
    %290 = vmatpush1.msra.mxu0 0.0
    %291 = vmatprep.subr.mxu0 0.0
    %292 = vmatpush1.msra.mxu0 0.0
    %293 = vmatprep.subr.mxu0 0.0
    %294 = vmatpush1.msra.mxu0 0.0
    %295 = vmatprep.subr.mxu0 0.0
    %296 = vmatpush1.msra.mxu0 0.0
    %297 = vmatprep.subr.mxu0 0.0
    %298 = vmatpush1.msra.mxu0 0.0
    %299 = vmatprep.subr.mxu0 0.0
    %300 = vmatpush1.msra.mxu0 0.0
    %301 = vmatprep.subr.mxu0 0.0
    %302 = vmatpush1.msra.mxu0 0.0
    %303 = vmatprep.subr.mxu0 0.0
    %304 = vmatpush1.msra.mxu0 0.0
    %305 = vmatprep.subr.mxu0 0.0
    %306 = vmatpush1.msra.mxu0 0.0
    %307 = vmatprep.subr.mxu0 0.0
    %308 = vmatpush1.msra.mxu0 0.0
    %309 = vmatprep.subr.mxu0 0.0
    %310 = vmatpush1.msra.mxu0 0.0
    %311 = vmatprep.subr.mxu0 0.0
    %312 = vmatpush1.msra.mxu0 0.0
    %313 = vmatprep.subr.mxu0 0.0
    %314 = vmatpush1.msra.mxu0 0.0
    %315 = vmatprep.subr.mxu0 0.0
    %316 = vmatpush1.msra.mxu0 0.0
    %317 = vmatprep.mubr.f32.mxu0 0.0
    %318 = vmatmul.mubr.f32.gmra.mrb[0].mxu0 %v228
    %v319 = vpop.f32.mrb[0].mxu0
    %v320 = vadd.f32 %v252, %v319
    %v321 = vpop.f32.mrb[0].mxu0
    %322 = vmatprep.mubr.f32.mxu0 0.0
    %323 = vmatmul.mubr.f32.gmra.mrb[0].mxu0 %v229
    %v324 = vpop.f32.mrb[0].mxu0
    %v325 = vadd.f32 %v252, %v324
    %v326 = vpop.f32.mrb[0].mxu0
    %327 = vmatprep.mubr.f32.mxu0 0.0
    %328 = vmatmul.mubr.f32.gmra.mrb[0].mxu0 %v230
    %v329 = vpop.f32.mrb[0].mxu0
    %v330 = vadd.f32 %v252, %v329
    %v331 = vpop.f32.mrb[0].mxu0
    %332 = vmatprep.mubr.f32.mxu0 0.0
    %333 = vmatmul.mubr.f32.gmra.mrb[0].mxu0 %v231
    %v334 = vpop.f32.mrb[0].mxu0
    %v335 = vadd.f32 %v252, %v334
    %v336 = vpop.f32.mrb[0].mxu0
    %337 = vdwg.mxu0
    %s338 = sld [smem:[#allocation12 + $0x1]]
    %vm339 = vcmp.ge.f32.partialorder %v320, 0.0
    %vm340 = vcmp.ge.f32.partialorder %v325, 0.0
    %vm341 = vcmp.ge.f32.partialorder %v330, 0.0
    %vm342 = vcmp.ge.f32.partialorder %v335, 0.0
    %v343 = vstv %s338
    %v344 = vmul.f32 %v343, %v320
    %v345 = vmul.f32 %v343, %v325
    %v346 = vmul.f32 %v343, %v330
    %v347 = vmul.f32 %v343, %v335
    %v348 = vsel %vm339, %v320, %v344
    %v349 = vsel %vm340, %v325, %v345
    %v350 = vsel %vm341, %v330, %v346
    %v351 = vsel %vm342, %v335, %v347
    %v352 = vld [vmem:[#allocation9] sm:$0xff]
    %v353 = vld [vmem:[#allocation9 + $0x8] sm:$0xff]
    %v354 = vld [vmem:[#allocation9 + $0x10] sm:$0xff]
    %v355 = vld [vmem:[#allocation9 + $0x18] sm:$0xff]
    %v356 = vld [vmem:[#allocation9 + $0x20] sm:$0xff]
    %v357 = vld [vmem:[#allocation9 + $0x28] sm:$0xff]
    %v358 = vld [vmem:[#allocation9 + $0x30] sm:$0xff]
    %v359 = vld [vmem:[#allocation9 + $0x38] sm:$0xff]
    %v360 = vld [vmem:[#allocation9 + $0x40] sm:$0xff]
    %v361 = vld [vmem:[#allocation9 + $0x48] sm:$0xff]
    %v362 = vld [vmem:[#allocation9 + $0x50] sm:$0xff]
    %v363 = vld [vmem:[#allocation9 + $0x58] sm:$0xff]
    %v364 = vld [vmem:[#allocation9 + $0x60] sm:$0xff]
    %v365 = vld [vmem:[#allocation9 + $0x68] sm:$0xff]
    %v366 = vld [vmem:[#allocation9 + $0x70] sm:$0xff]
    %v367 = vld [vmem:[#allocation9 + $0x78] sm:$0xff]
    %v368 = vld [vmem:[%s5 + $0x2] sm:$0x1]
    %v369 = vlaneseq
    %v370 = vshrl.u32 %v369, 7
    %v371 = vsub.s32 0, %v370
    %v372 = vrot.slane %v368, %v371
    %373 = vmatprep.subr.mxu0 0.0
    %374 = vmatpush1.msra.mxu0 %v352
    %375 = vmatprep.subr.mxu0 0.0
    %376 = vmatpush1.msra.mxu0 %v353
    %377 = vmatprep.subr.mxu0 0.0
    %378 = vmatpush1.msra.mxu0 %v354
    %379 = vmatprep.subr.mxu0 0.0
    %380 = vmatpush1.msra.mxu0 %v355
    %381 = vmatprep.subr.mxu0 0.0
    %382 = vmatpush1.msra.mxu0 %v356
    %383 = vmatprep.subr.mxu0 0.0
    %384 = vmatpush1.msra.mxu0 %v357
    %385 = vmatprep.subr.mxu0 0.0
    %386 = vmatpush1.msra.mxu0 %v358
    %387 = vmatprep.subr.mxu0 0.0
    %388 = vmatpush1.msra.mxu0 %v359
    %389 = vmatprep.subr.mxu0 0.0
    %390 = vmatpush1.msra.mxu0 %v360
    %391 = vmatprep.subr.mxu0 0.0
    %392 = vmatpush1.msra.mxu0 %v361
    %393 = vmatprep.subr.mxu0 0.0
    %394 = vmatpush1.msra.mxu0 %v362
    %395 = vmatprep.subr.mxu0 0.0
    %396 = vmatpush1.msra.mxu0 %v363
    %397 = vmatprep.subr.mxu0 0.0
    %398 = vmatpush1.msra.mxu0 %v364
    %399 = vmatprep.subr.mxu0 0.0
    %400 = vmatpush1.msra.mxu0 %v365
    %401 = vmatprep.subr.mxu0 0.0
    %402 = vmatpush1.msra.mxu0 %v366
    %403 = vmatprep.subr.mxu0 0.0
    %404 = vmatpush1.msra.mxu0 %v367
    %405 = vmatprep.subr.mxu0 0.0
    %406 = vmatpush1.msra.mxu0 0.0
    %407 = vmatprep.subr.mxu0 0.0
    %408 = vmatpush1.msra.mxu0 0.0
    %409 = vmatprep.subr.mxu0 0.0
    %410 = vmatpush1.msra.mxu0 0.0
    %411 = vmatprep.subr.mxu0 0.0
    %412 = vmatpush1.msra.mxu0 0.0
    %413 = vmatprep.subr.mxu0 0.0
    %414 = vmatpush1.msra.mxu0 0.0
    %415 = vmatprep.subr.mxu0 0.0
    %416 = vmatpush1.msra.mxu0 0.0
    %417 = vmatprep.subr.mxu0 0.0
    %418 = vmatpush1.msra.mxu0 0.0
    %419 = vmatprep.subr.mxu0 0.0
    %420 = vmatpush1.msra.mxu0 0.0
    %421 = vmatprep.subr.mxu0 0.0
    %422 = vmatpush1.msra.mxu0 0.0
    %423 = vmatprep.subr.mxu0 0.0
    %424 = vmatpush1.msra.mxu0 0.0
    %425 = vmatprep.subr.mxu0 0.0
    %426 = vmatpush1.msra.mxu0 0.0
    %427 = vmatprep.subr.mxu0 0.0
    %428 = vmatpush1.msra.mxu0 0.0
    %429 = vmatprep.subr.mxu0 0.0
    %430 = vmatpush1.msra.mxu0 0.0
    %431 = vmatprep.subr.mxu0 0.0
    %432 = vmatpush1.msra.mxu0 0.0
    %433 = vmatprep.subr.mxu0 0.0
    %434 = vmatpush1.msra.mxu0 0.0
    %435 = vmatprep.subr.mxu0 0.0
    %436 = vmatpush1.msra.mxu0 0.0
    %437 = vmatprep.mubr.f32.mxu0 0.0
    %438 = vmatmul.mubr.f32.gmra.mrb[0].mxu0 %v348
    %v439 = vpop.f32.mrb[0].mxu0
    %v440 = vadd.f32 %v372, %v439
    %v441 = vpop.f32.mrb[0].mxu0
    %442 = vmatprep.mubr.f32.mxu0 0.0
    %443 = vmatmul.mubr.f32.gmra.mrb[0].mxu0 %v349
    %v444 = vpop.f32.mrb[0].mxu0
    %v445 = vadd.f32 %v372, %v444
    %v446 = vpop.f32.mrb[0].mxu0
    %447 = vmatprep.mubr.f32.mxu0 0.0
    %448 = vmatmul.mubr.f32.gmra.mrb[0].mxu0 %v350
    %v449 = vpop.f32.mrb[0].mxu0
    %v450 = vadd.f32 %v372, %v449
    %v451 = vpop.f32.mrb[0].mxu0
    %452 = vmatprep.mubr.f32.mxu0 0.0
    %453 = vmatmul.mubr.f32.gmra.mrb[0].mxu0 %v351
    %v454 = vpop.f32.mrb[0].mxu0
    %v455 = vadd.f32 %v372, %v454
    %v456 = vpop.f32.mrb[0].mxu0
    %457 = vdwg.mxu0
    %s458 = sld [smem:[#allocation12 + $0x2]]
    %vm459 = vcmp.ge.f32.partialorder %v440, 0.0
    %vm460 = vcmp.ge.f32.partialorder %v445, 0.0
    %vm461 = vcmp.ge.f32.partialorder %v450, 0.0
    %vm462 = vcmp.ge.f32.partialorder %v455, 0.0
    %v463 = vstv %s458
    %v464 = vmul.f32 %v463, %v440
    %v465 = vmul.f32 %v463, %v445
    %v466 = vmul.f32 %v463, %v450
    %v467 = vmul.f32 %v463, %v455
    %v468 = vsel %vm459, %v440, %v464
    %v469 = vsel %vm460, %v445, %v465
    %v470 = vsel %vm461, %v450, %v466
    %v471 = vsel %vm462, %v455, %v467
    %v472 = vld [vmem:[#allocation11] sm:$0xff]
    %v473 = vld [vmem:[#allocation11 + $0x8] sm:$0xff]
    %v474 = vld [vmem:[#allocation11 + $0x10] sm:$0xff]
    %v475 = vld [vmem:[#allocation11 + $0x18] sm:$0xff]
    %v476 = vld [vmem:[#allocation11 + $0x20] sm:$0xff]
    %v477 = vld [vmem:[#allocation11 + $0x28] sm:$0xff]
    %v478 = vld [vmem:[#allocation11 + $0x30] sm:$0xff]
    %v479 = vld [vmem:[#allocation11 + $0x38] sm:$0xff]
    %v480 = vld [vmem:[#allocation11 + $0x40] sm:$0xff]
    %v481 = vld [vmem:[#allocation11 + $0x48] sm:$0xff]
    %v482 = vld [vmem:[#allocation11 + $0x50] sm:$0xff]
    %v483 = vld [vmem:[#allocation11 + $0x58] sm:$0xff]
    %v484 = vld [vmem:[#allocation11 + $0x60] sm:$0xff]
    %v485 = vld [vmem:[#allocation11 + $0x68] sm:$0xff]
    %v486 = vld [vmem:[#allocation11 + $0x70] sm:$0xff]
    %v487 = vld [vmem:[#allocation11 + $0x78] sm:$0xff]
    %488 = vmatprep.subr.mxu0 0.0
    %489 = vmatpush1.msra.mxu0 %v472
    %490 = vmatprep.subr.mxu0 0.0
    %491 = vmatpush1.msra.mxu0 %v473
    %492 = vmatprep.subr.mxu0 0.0
    %493 = vmatpush1.msra.mxu0 %v474
    %494 = vmatprep.subr.mxu0 0.0
    %495 = vmatpush1.msra.mxu0 %v475
    %496 = vmatprep.subr.mxu0 0.0
    %497 = vmatpush1.msra.mxu0 %v476
    %498 = vmatprep.subr.mxu0 0.0
    %499 = vmatpush1.msra.mxu0 %v477
    %500 = vmatprep.subr.mxu0 0.0
    %501 = vmatpush1.msra.mxu0 %v478
    %502 = vmatprep.subr.mxu0 0.0
    %503 = vmatpush1.msra.mxu0 %v479
    %504 = vmatprep.subr.mxu0 0.0
    %505 = vmatpush1.msra.mxu0 %v480
    %506 = vmatprep.subr.mxu0 0.0
    %507 = vmatpush1.msra.mxu0 %v481
    %508 = vmatprep.subr.mxu0 0.0
    %509 = vmatpush1.msra.mxu0 %v482
    %510 = vmatprep.subr.mxu0 0.0
    %511 = vmatpush1.msra.mxu0 %v483
    %512 = vmatprep.subr.mxu0 0.0
    %513 = vmatpush1.msra.mxu0 %v484
    %514 = vmatprep.subr.mxu0 0.0
    %515 = vmatpush1.msra.mxu0 %v485
    %516 = vmatprep.subr.mxu0 0.0
    %517 = vmatpush1.msra.mxu0 %v486
    %518 = vmatprep.subr.mxu0 0.0
    %519 = vmatpush1.msra.mxu0 %v487
    %520 = vmatprep.subr.mxu0 0.0
    %521 = vmatpush1.msra.mxu0 0.0
    %522 = vmatprep.subr.mxu0 0.0
    %523 = vmatpush1.msra.mxu0 0.0
    %524 = vmatprep.subr.mxu0 0.0
    %525 = vmatpush1.msra.mxu0 0.0
    %526 = vmatprep.subr.mxu0 0.0
    %527 = vmatpush1.msra.mxu0 0.0
    %528 = vmatprep.subr.mxu0 0.0
    %529 = vmatpush1.msra.mxu0 0.0
    %530 = vmatprep.subr.mxu0 0.0
    %531 = vmatpush1.msra.mxu0 0.0
    %532 = vmatprep.subr.mxu0 0.0
    %533 = vmatpush1.msra.mxu0 0.0
    %534 = vmatprep.subr.mxu0 0.0
    %535 = vmatpush1.msra.mxu0 0.0
    %536 = vmatprep.subr.mxu0 0.0
    %537 = vmatpush1.msra.mxu0 0.0
    %538 = vmatprep.subr.mxu0 0.0
    %539 = vmatpush1.msra.mxu0 0.0
    %540 = vmatprep.subr.mxu0 0.0
    %541 = vmatpush1.msra.mxu0 0.0
    %542 = vmatprep.subr.mxu0 0.0
    %543 = vmatpush1.msra.mxu0 0.0
    %544 = vmatprep.subr.mxu0 0.0
    %545 = vmatpush1.msra.mxu0 0.0
    %546 = vmatprep.subr.mxu0 0.0
    %547 = vmatpush1.msra.mxu0 0.0
    %548 = vmatprep.subr.mxu0 0.0
    %549 = vmatpush1.msra.mxu0 0.0
    %550 = vmatprep.subr.mxu0 0.0
    %551 = vmatpush1.msra.mxu0 0.0
    %552 = vmatprep.mubr.f32.mxu0 0.0
    %553 = vmatmul.mubr.f32.gmra.mrb[0].mxu0 %v108
    %v554 = vpop.f32.mrb[0].mxu0
    %v555 = vadd.f32 0.0, %v554
    %v556 = vpop.f32.mrb[0].mxu0
    %557 = vmatprep.mubr.f32.mxu0 0.0
    %558 = vmatmul.mubr.f32.gmra.mrb[0].mxu0 %v109
    %v559 = vpop.f32.mrb[0].mxu0
    %v560 = vadd.f32 0.0, %v559
    %v561 = vpop.f32.mrb[0].mxu0
    %562 = vmatprep.mubr.f32.mxu0 0.0
    %563 = vmatmul.mubr.f32.gmra.mrb[0].mxu0 %v110
    %v564 = vpop.f32.mrb[0].mxu0
    %v565 = vadd.f32 0.0, %v564
    %v566 = vpop.f32.mrb[0].mxu0
    %567 = vmatprep.mubr.f32.mxu0 0.0
    %568 = vmatmul.mubr.f32.gmra.mrb[0].mxu0 %v111
    %v569 = vpop.f32.mrb[0].mxu0
    %v570 = vadd.f32 0.0, %v569
    %v571 = vpop.f32.mrb[0].mxu0
    %572 = vdwg.mxu0
    %v573 = vadd.f32 %v468, %v555
    %v574 = vadd.f32 %v469, %v560
    %v575 = vadd.f32 %v470, %v565
    %v576 = vadd.f32 %v471, %v570
    %v577 = vld [vmem:[%s5 + $0x3] sm:$0x1]
    %v578 = vlaneseq
    %v579 = vshrl.u32 %v578, 7
    %v580 = vsub.s32 0, %v579
    %v581 = vrot.slane %v577, %v580
    %v582 = vadd.f32 %v573, %v581
    %v583 = vadd.f32 %v574, %v581
    %v584 = vadd.f32 %v575, %v581
    %v585 = vadd.f32 %v576, %v581
    %586 = vst [vmem:[#allocation13] sm:$0xff] %v582
    %587 = vst [vmem:[#allocation13 + $0x8] sm:$0xff] %v583
    %588 = vst [vmem:[#allocation13 + $0x10] sm:$0xff] %v584
    %589 = vst [vmem:[#allocation13 + $0x18] sm:$0xff] %v585
    // Predicated region
    $region54: #{tpu_custom_call.1} parent=1 // pred_check
      _
    $region55: #{tpu_custom_call.1} parent=1 // pred_check_branch
      %591 = sbr.rel (0) target = $region57
    $region56: #{tpu_custom_call.1} parent=1 // pred_region
      %s593 = ssub.s32 512, 512
      %594 = vsyncadd [#allocation4], %s593
      %s595 = sshll.u32 [#allocation13], 4
      %s596 = int_to_ptr.vmem [resolvable:$true] %s595
      %601 = dma.vmem_to_hbm [thread:$0]  %s596, 512, %s7, [#allocation4], 128, 128, 8
    $region57: #{tpu_custom_call.1} parent=1 // pred_fallthru
      _
    // Predicated region
    $region58: #{tpu_custom_call.1} parent=1 // pred_check
      _
    $region59: #{tpu_custom_call.1} parent=1 // pred_check_branch
      %603 = sbr.rel (0) target = $region61
    $region60: #{tpu_custom_call.1} parent=1 // pred_region
      %604 = dma.done [#allocation4], 512
    $region61: #{tpu_custom_call.1} parent=1 // pred_fallthru
      _
    %605 = vsyncpa [#allocation3], 1
    %606 = vsyncpa [#allocation7], 1
    %607 = vsyncpa [#allocation10], 1
    %608 = vsyncpa [#allocation4], 1
    %609 = vsyncpa [#allocation5], 1

</llo_original>
